<compile_context>
chip_gen: v5e
topology: v5e:2x2
jax: 0.10.0
libtpu: 0.0.40
codegen_flags: <defaults>
</compile_context>

<pallas_src>
import jax
import jax.numpy as jnp
from jax import lax
from jax.experimental import pallas as pl
from jax.experimental.pallas import tpu as pltpu


_FULL_K_TILE_CAP = 2048                  # contract the whole K in one tile up to this size
_VMEM_TILE_BUDGET = 20 * 1024 * 1024     # double-buffered tile footprint target (fits v7x)


def _round_up(x, m):
    return ((x + m - 1) // m) * m


def _k_plan(din):
    """(Kp, tk): padded K extent and K tile. Kp == din (no padding) unless din is large."""
    if din <= _FULL_K_TILE_CAP:
        return din, din                  # single K step; full-dim block needs no padding/alignment
    tk = 512                             # multiple of 256: fills the v6e/v7x 256x256 MXU
    return _round_up(din, tk), tk


def _mn_plan(m, dout, tk, x_itemsize, w_itemsize):
    """Pick (tm, tn) so double-buffered tiles fit the VMEM budget; cover all of M if possible."""
    tn = dout if dout <= 256 else 256
    w_tile = 2 * tk * tn * w_itemsize                       # double-buffered weight tile
    bias_tile = 2 * 8 * _round_up(tn, 128) * 4
    per_row = 2 * (tk * x_itemsize + tn * 4)                # x tile + resident f32 output tile
    avail = max(_VMEM_TILE_BUDGET - w_tile - bias_tile, 8 * per_row)
    max_tm = max(8, (avail // per_row) // 8 * 8)
    if m <= max_tm:
        return m, tn      # full-batch tile: the weight streams from HBM exactly once
    return min(512, max_tm), tn


def _linear_kernel(x_ref, w_ref, b_ref, o_ref):
    """One (tm, tn) output tile; K is the innermost (reduction) grid axis.

    The output block's index_map ignores k, so o_ref stays VMEM-resident across the K axis
    and doubles as the f32 accumulator (no scratch, no epilogue copy).
    """
    k = pl.program_id(2)

    @pl.when(k == 0)
    def _():
        # Initialize the accumulator with the broadcast bias (removes the epilogue add).
        o_ref[...] = jnp.broadcast_to(b_ref[...].astype(jnp.float32), o_ref.shape)

    # x_ref: (tm, tk); w_ref: (tk, tn) -- canonical (K, N) feed, no transposed RHS.
    o_ref[...] += lax.dot_general(
        x_ref[...],
        w_ref[...],
        dimension_numbers=(((1,), (0,)), ((), ())),
        preferred_element_type=jnp.float32,
    )


def prepare_projection_params(weight, bias, param_dtype=None):
    """One-time (parameter-load-time) layout prep; NOT in the per-call hot path.

    weight: (out, in) -- PyTorch nn.Linear layout; bias: (out,).
    Returns {'w_t': (Kp, out), 'bias': (1, out) f32} with the weight transposed to a canonical
    (K, N) layout and its K axis zero-padded only if the K tiling requires it.
    param_dtype=jnp.bfloat16 feeds the MXU at bf16 rate (accumulation stays f32).
    """
    dout, din = weight.shape
    assert bias.shape == (dout,)
    kp, _ = _k_plan(din)
    w_t = jnp.asarray(weight).T                              # (din, dout)
    if param_dtype is not None:
        w_t = w_t.astype(param_dtype)
    if kp != din:
        w_t = jnp.pad(w_t, ((0, kp - din), (0, 0)))          # zero-pad K once, here only
    bias_row = jnp.asarray(bias, jnp.float32).reshape(1, dout)
    return {"w_t": w_t, "bias": bias_row}


@jax.jit
def projection_head_forward(x, w_t, bias_row):
    """y = x @ W^T + b, with W pre-transposed/padded by prepare_projection_params."""
    m, din = x.shape
    kp, tk = _k_plan(din)
    kp_w, dout = w_t.shape
    assert kp_w == kp, "weight was not prepared with prepare_projection_params"
    assert bias_row.shape == (1, dout)
    out_dtype = x.dtype

    # Tiny problems: pallas_call fixed overhead dominates -- let XLA's fused dot handle them.
    if m < 8 or din < 128 or dout < 128:
        y = jnp.dot(x, w_t[:din], preferred_element_type=jnp.float32) + bias_row
        return y.astype(out_dtype)

    compute_dtype = w_t.dtype
    x_c = x.astype(compute_dtype) if x.dtype != compute_dtype else x
    if kp != din:
        # Only the reduction axis is ever zero-padded (required for a correct K sum).
        x_c = jnp.pad(x_c, ((0, 0), (0, kp - din)))

    x_b = jnp.dtype(compute_dtype).itemsize
    w_b = jnp.dtype(w_t.dtype).itemsize
    tm, tn = _mn_plan(m, dout, tk, x_b, w_b)

    grid_m = pl.cdiv(m, tm)      # ragged last M tile: no row over-padding
    grid_n = pl.cdiv(dout, tn)   # ragged last N tile: no col over-padding
    grid_k = kp // tk            # K always tiles exactly (padded above if needed)

    cost = pl.CostEstimate(
        flops=2 * m * dout * kp,
        bytes_accessed=(m * kp * x_b + grid_m * kp * dout * w_b + dout * 4 + m * dout * 4),
        transcendentals=0,
    )

    out = pl.pallas_call(
        _linear_kernel,
        out_shape=jax.ShapeDtypeStruct((m, dout), jnp.float32),
        grid_spec=pltpu.PrefetchScalarGridSpec(
            num_scalar_prefetch=0,
            grid=(grid_m, grid_n, grid_k),
            in_specs=[
                pl.BlockSpec((tm, tk), lambda i, j, k: (i, k)),   # activations
                pl.BlockSpec((tk, tn), lambda i, j, k: (k, j)),   # weight, canonical (K, N)
                pl.BlockSpec((1, tn), lambda i, j, k: (0, j)),    # bias row
            ],
            out_specs=pl.BlockSpec((tm, tn), lambda i, j, k: (i, j)),
        ),
        compiler_params=pltpu.CompilerParams(
            dimension_semantics=("parallel", "parallel", "arbitrary"),
            vmem_limit_bytes=32 * 1024 * 1024,
        ),
        cost_estimate=cost,
    )(x_c, w_t, bias_row)

    return out.astype(out_dtype) if out.dtype != out_dtype else out


if __name__ == "__main__":
    def init_linear(key, din, dout):
        kw, kb = jax.random.split(key)
        bound = 1.0 / (din ** 0.5)       # torch.nn.Linear default init
        w = jax.random.uniform(kw, (dout, din), jnp.float32, -bound, bound)
        b = jax.random.uniform(kb, (dout,), jnp.float32, -bound, bound)
        return w, b

    k1, k2, k3, k4 = jax.random.split(jax.random.PRNGKey(0), 4)

    # 1) Small projection-head shapes on the Pallas path (grid (1,1,1), weight streamed once).
    kx, kp_ = jax.random.split(k1)
    B, Din, Dout = 16, 256, 128
    w, b = init_linear(kp_, Din, Dout)
    x = jax.random.normal(kx, (B, Din), jnp.float32)
    params = prepare_projection_params(w, b)
    out = jax.block_until_ready(projection_head_forward(x, params["w_t"], params["bias"]))
    ref = x @ w.T + b
    assert out.shape == ref.shape and out.dtype == x.dtype
    assert jnp.allclose(out, ref, atol=2e-3, rtol=2e-3), "pallas path mismatch"

    # 2) Ragged M / unaligned K / multi-tile ragged N (no tile-multiple over-padding anywhere).
    kx, kp_ = jax.random.split(k2)
    B, Din, Dout = 300, 300, 384
    w, b = init_linear(kp_, Din, Dout)
    x = jax.random.normal(kx, (B, Din), jnp.float32)
    params = prepare_projection_params(w, b)
    out = jax.block_until_ready(projection_head_forward(x, params["w_t"], params["bias"]))
    ref = x @ w.T + b
    assert out.shape == (B, Dout)
    assert jnp.allclose(out, ref, atol=5e-3, rtol=5e-3), "ragged path mismatch"

    # 3) bf16 parameter feed (f32 accumulation) -- the MXU-rate / half-HBM-bytes path.
    kx, kp_ = jax.random.split(k3)
    B, Din, Dout = 128, 1024, 256
    w, b = init_linear(kp_, Din, Dout)
    x = jax.random.normal(kx, (B, Din), jnp.float32)
    params = prepare_projection_params(w, b, param_dtype=jnp.bfloat16)
    out = jax.block_until_ready(projection_head_forward(x, params["w_t"], params["bias"]))
    ref = x @ w.T + b
    assert out.dtype == jnp.float32
    assert jnp.allclose(out, ref, atol=5e-2, rtol=5e-2), "bf16 path mismatch"

    # 4) Tiny module-like shapes (input_size=32, output_size=16) -> jnp.dot fast path.
    kx, kp_ = jax.random.split(k4)
    B, Din, Dout = 8, 32, 16
    w, b = init_linear(kp_, Din, Dout)
    x = jax.random.normal(kx, (B, Din), jnp.float32)
    params = prepare_projection_params(w, b)
    out = jax.block_until_ready(projection_head_forward(x, params["w_t"], params["bias"]))
    ref = x @ w.T + b
    assert jnp.allclose(out, ref, atol=1e-5, rtol=1e-5), "fast path mismatch"

    print("KERNEL_OK")
</pallas_src>

<mosaic_0001>
module attributes {stable_mosaic.version = 11 : i64} {
  func.func @_linear_kernel(%arg0: i32, %arg1: i32, %arg2: i32, %arg3: memref<16x256xf32, #tpu.memory_space<vmem>>, %arg4: memref<256x128xf32, #tpu.memory_space<vmem>>, %arg5: memref<1x128xf32, #tpu.memory_space<vmem>>, %arg6: memref<16x128xf32, #tpu.memory_space<vmem>>) attributes {dimension_semantics = [#tpu.dimension_semantics<parallel>, #tpu.dimension_semantics<parallel>, #tpu.dimension_semantics<arbitrary>], iteration_bounds = array<i64: 1, 1, 1>, scalar_prefetch = 0 : i64, scratch_operands = 0 : i64, tpu.core_type = #tpu.core_type<tc>, window_params = [{transform_indices = @transform_0, window_bounds = array<i64: 16, 256>}, {transform_indices = @transform_1, window_bounds = array<i64: 256, 128>}, {transform_indices = @transform_2, window_bounds = array<i64: 1, 128>}, {transform_indices = @transform_3, window_bounds = array<i64: 16, 128>}]} {
    %c0_i32 = arith.constant 0 : i32
    %0 = arith.cmpi eq, %arg2, %c0_i32 : i32
    %1 = arith.extui %0 : i1 to i32
    %c0_i32_0 = arith.constant 0 : i32
    %2 = arith.cmpi ne, %1, %c0_i32_0 : i32
    scf.if %2 {
      %c0_8 = arith.constant 0 : index
      %c0_9 = arith.constant 0 : index
      %9 = vector.load %arg5[%c0_8, %c0_9] : memref<1x128xf32, #tpu.memory_space<vmem>>, vector<1x128xf32>
      %10 = vector.shape_cast %9 : vector<1x128xf32> to vector<1x128xf32>
      %11 = vector.broadcast %10 : vector<1x128xf32> to vector<16x128xf32>
      %c0_10 = arith.constant 0 : index
      %c0_11 = arith.constant 0 : index
      %12 = vector.load %arg6[%c0_10, %c0_11] : memref<16x128xf32, #tpu.memory_space<vmem>>, vector<16x128xf32>
      tpu.vector_store %arg6[%c0_10, %c0_11], %11 {strides = array<i32>} : memref<16x128xf32, #tpu.memory_space<vmem>>, vector<16x128xf32>,
    } else {
    }
    %c0 = arith.constant 0 : index
    %c0_1 = arith.constant 0 : index
    %3 = vector.load %arg6[%c0, %c0_1] : memref<16x128xf32, #tpu.memory_space<vmem>>, vector<16x128xf32>
    %c0_2 = arith.constant 0 : index
    %c0_3 = arith.constant 0 : index
    %4 = vector.load %arg3[%c0_2, %c0_3] : memref<16x256xf32, #tpu.memory_space<vmem>>, vector<16x256xf32>
    %c0_4 = arith.constant 0 : index
    %c0_5 = arith.constant 0 : index
    %5 = vector.load %arg4[%c0_4, %c0_5] : memref<256x128xf32, #tpu.memory_space<vmem>>, vector<256x128xf32>
    %cst = arith.constant dense<0.000000e+00> : vector<16x128xf32>
    %6 = tpu.matmul %4, %5, %cst {dimension_numbers = #tpu.dot_dimension_numbers<[1], [0], [0], [1], [0, 0, 1, 1], [], []>} : vector<16x256xf32>, vector<256x128xf32>, vector<16x128xf32> -> vector<16x128xf32>
    %7 = arith.addf %3, %6 : vector<16x128xf32>
    %c0_6 = arith.constant 0 : index
    %c0_7 = arith.constant 0 : index
    %8 = vector.load %arg6[%c0_6, %c0_7] : memref<16x128xf32, #tpu.memory_space<vmem>>, vector<16x128xf32>
    tpu.vector_store %arg6[%c0_6, %c0_7], %7 {strides = array<i32>} : memref<16x128xf32, #tpu.memory_space<vmem>>, vector<16x128xf32>,
    return
  }
  func.func @transform_0(%arg0: i32, %arg1: i32, %arg2: i32) -> (i32, i32) {
    %c0_i32 = arith.constant 0 : i32
    return %arg0, %arg2 : i32, i32
  }
  func.func @transform_1(%arg0: i32, %arg1: i32, %arg2: i32) -> (i32, i32) {
    %c0_i32 = arith.constant 0 : i32
    return %arg2, %arg1 : i32, i32
  }
  func.func @transform_2(%arg0: i32, %arg1: i32, %arg2: i32) -> (i32, i32) {
    %c0_i32 = arith.constant 0 : i32
    %c0_i32_0 = arith.constant 0 : i32
    return %c0_i32, %arg1 : i32, i32
  }
  func.func @transform_3(%arg0: i32, %arg1: i32, %arg2: i32) -> (i32, i32) {
    %c0_i32 = arith.constant 0 : i32
    return %arg0, %arg1 : i32, i32
  }
}

</mosaic_0001>

<llo_original>
// kernel: projection_head_forward.1
$region0: #{projection_head_forward.1}
  #allocation0 [shape = 'u32[]', space=smem, size = 0x4, offset = 0x4, fixed_abs, tag = 'smem constant byte address 0x4 - core index']
  #allocation1 [shape = 'u32[72,128]{1,0:T(1,128)}', space=vmem, size = 0x9000, scoped, tag = 'internal scratch']
  %s0 = inlined_call_operand.hbm [shape: f32[16,256], index: 0, kind: input, shape index: {}]
  %s1 = inlined_call_operand.hbm [shape: f32[256,128], index: 1, kind: input, shape index: {}]
  %s2 = inlined_call_operand.vmem [shape: f32[1,128], index: 2, kind: input, shape index: {}]
  %s3 = inlined_call_operand.hbm [shape: f32[16,128], index: 3, kind: output, shape index: {}]
  %s4 = sld [smem:[#allocation0]]
  $region34: #{projection_head_forward.1} parent=0
    _
  %s6 = ssub.s32 1, %s4
  %s7 = scalar_select 0, %s6, %s4
  $region1: #{projection_head_forward.1} parent=0
    #allocation2 [shape = 'u8[16384]{0}', space=vmem, size = 0x4000, scoped, tag = 'input window, operand 0, single buffered']
    #allocation3 [shape = 's32[1]{0}', space=sflag, size = 0x4, scoped, tag = 'scoped memory for projection_head_forward.1']
    #allocation4 [shape = 's32[1]{0}', space=sflag, size = 0x4, scoped, tag = 'scoped memory for projection_head_forward.1']
    #allocation5 [shape = 'u8[131072]{0}', space=vmem, size = 0x20000, scoped, tag = 'input window, operand 1, single buffered']
    #allocation6 [shape = 's32[1]{0}', space=sflag, size = 0x4, scoped, tag = 'scoped memory for projection_head_forward.1']
    #allocation7 [shape = 'u8[8192]{0}', space=vmem, size = 0x2000, scoped, tag = 'output window, operand 0, single buffered']
    %8 = vsyncpa [#allocation3], 0
    %9 = vsyncpa [#allocation6], 0
    %10 = vsyncpa [#allocation4], 0
    // Predicated region
    $region2: #{projection_head_forward.1} parent=1 // pred_check
      _
    $region3: #{projection_head_forward.1} parent=1 // pred_check_branch
      %12 = sbr.rel (0) target = $region5
    $region4: #{projection_head_forward.1} parent=1 // pred_region
      %14 = vsyncadd [#allocation3], 0
      %s15 = sshll.u32 %s0, 4
      %s16 = int_to_ptr.hbm [resolvable:$true] %s15
      %s17 = sshll.u32 [#allocation2], 4
      %s18 = int_to_ptr.vmem [resolvable:$true] %s17
      %23 = dma.hbm_to_vmem [thread:$0]  %s16, 512, %s18, [#allocation3], 256, 256, 16
    $region5: #{projection_head_forward.1} parent=1 // pred_fallthru
      _
    // Predicated region
    $region6: #{projection_head_forward.1} parent=1 // pred_check
      _
    $region7: #{projection_head_forward.1} parent=1 // pred_check_branch
      %25 = sbr.rel (0) target = $region9
    $region8: #{projection_head_forward.1} parent=1 // pred_region
      %27 = vsyncadd [#allocation6], 0
      %s28 = sshll.u32 %s1, 4
      %s29 = int_to_ptr.hbm [resolvable:$true] %s28
      %s30 = sshll.u32 [#allocation5], 4
      %s31 = int_to_ptr.vmem [resolvable:$true] %s30
      %36 = dma.hbm_to_vmem [thread:$0]  %s29, 4096, %s31, [#allocation6], 128, 128, 8
    $region9: #{projection_head_forward.1} parent=1 // pred_fallthru
      _
    // Predicated region
    $region10: #{projection_head_forward.1} parent=1 // pred_check
      _
    $region11: #{projection_head_forward.1} parent=1 // pred_check_branch
      %38 = sbr.rel (0) target = $region13
    $region12: #{projection_head_forward.1} parent=1 // pred_region
      _
    $region13: #{projection_head_forward.1} parent=1 // pred_fallthru
      _
    // Predicated region
    $region14: #{projection_head_forward.1} parent=1 // pred_check
      _
    $region15: #{projection_head_forward.1} parent=1 // pred_check_branch
      %40 = sbr.rel (0) target = $region17
    $region16: #{projection_head_forward.1} parent=1 // pred_region
      %42 = dma.done [#allocation3], 512
    $region17: #{projection_head_forward.1} parent=1 // pred_fallthru
      _
    // Predicated region
    $region18: #{projection_head_forward.1} parent=1 // pred_check
      _
    $region19: #{projection_head_forward.1} parent=1 // pred_check_branch
      %44 = sbr.rel (0) target = $region21
    $region20: #{projection_head_forward.1} parent=1 // pred_region
      %46 = dma.done [#allocation6], 4096
    $region21: #{projection_head_forward.1} parent=1 // pred_fallthru
      _
    %p47 = scmp.eq.s32.totalorder 0, 0
    // Predicated region
    $region22: #{projection_head_forward.1} parent=1 // pred_check
      %p48 = pneg %p47
    $region23: #{projection_head_forward.1} parent=1 // pred_check_branch
      %50 = sbr.rel (%p48) target = $region25
    $region24: #{projection_head_forward.1} parent=1 // pred_region
      %v51 = vld [vmem:[%s2] sm:$0x1]
      %v53 = vperm.slane %v51, 0
      %55 = vst [vmem:[#allocation7] sm:$0xff] %v53
      %56 = vst [vmem:[#allocation7 + $0x8] sm:$0xff] %v53
    $region25: #{projection_head_forward.1} parent=1 // pred_fallthru
      _
    %v57 = vld [vmem:[#allocation7] sm:$0xff]
    %v58 = vld [vmem:[#allocation7 + $0x8] sm:$0xff]
    %v59 = vld [vmem:[#allocation2] sm:$0xff]
    %v60 = vld [vmem:[#allocation2 + $0x8] sm:$0xff]
    %v61 = vld [vmem:[#allocation2 + $0x10] sm:$0xff]
    %v62 = vld [vmem:[#allocation2 + $0x18] sm:$0xff]
    %v63 = vld [vmem:[#allocation5] sm:$0xff]
    %v64 = vld [vmem:[#allocation5 + $0x8] sm:$0xff]
    %v65 = vld [vmem:[#allocation5 + $0x10] sm:$0xff]
    %v66 = vld [vmem:[#allocation5 + $0x18] sm:$0xff]
    %v67 = vld [vmem:[#allocation5 + $0x20] sm:$0xff]
    %v68 = vld [vmem:[#allocation5 + $0x28] sm:$0xff]
    %v69 = vld [vmem:[#allocation5 + $0x30] sm:$0xff]
    %v70 = vld [vmem:[#allocation5 + $0x38] sm:$0xff]
    %v71 = vld [vmem:[#allocation5 + $0x40] sm:$0xff]
    %v72 = vld [vmem:[#allocation5 + $0x48] sm:$0xff]
    %v73 = vld [vmem:[#allocation5 + $0x50] sm:$0xff]
    %v74 = vld [vmem:[#allocation5 + $0x58] sm:$0xff]
    %v75 = vld [vmem:[#allocation5 + $0x60] sm:$0xff]
    %v76 = vld [vmem:[#allocation5 + $0x68] sm:$0xff]
    %v77 = vld [vmem:[#allocation5 + $0x70] sm:$0xff]
    %v78 = vld [vmem:[#allocation5 + $0x78] sm:$0xff]
    %v79 = vld [vmem:[#allocation5 + $0x80] sm:$0xff]
    %v80 = vld [vmem:[#allocation5 + $0x88] sm:$0xff]
    %v81 = vld [vmem:[#allocation5 + $0x90] sm:$0xff]
    %v82 = vld [vmem:[#allocation5 + $0x98] sm:$0xff]
    %v83 = vld [vmem:[#allocation5 + $0xa0] sm:$0xff]
    %v84 = vld [vmem:[#allocation5 + $0xa8] sm:$0xff]
    %v85 = vld [vmem:[#allocation5 + $0xb0] sm:$0xff]
    %v86 = vld [vmem:[#allocation5 + $0xb8] sm:$0xff]
    %v87 = vld [vmem:[#allocation5 + $0xc0] sm:$0xff]
    %v88 = vld [vmem:[#allocation5 + $0xc8] sm:$0xff]
    %v89 = vld [vmem:[#allocation5 + $0xd0] sm:$0xff]
    %v90 = vld [vmem:[#allocation5 + $0xd8] sm:$0xff]
    %v91 = vld [vmem:[#allocation5 + $0xe0] sm:$0xff]
    %v92 = vld [vmem:[#allocation5 + $0xe8] sm:$0xff]
    %v93 = vld [vmem:[#allocation5 + $0xf0] sm:$0xff]
    %v94 = vld [vmem:[#allocation5 + $0xf8] sm:$0xff]
    %95 = vmatpush.msra.mxu0 %v78
    %96 = vmatpush.msra.mxu0 %v77
    %97 = vmatpush.msra.mxu0 %v76
    %98 = vmatpush.msra.mxu0 %v75
    %99 = vmatpush.msra.mxu0 %v74
    %100 = vmatpush.msra.mxu0 %v73
    %101 = vmatpush.msra.mxu0 %v72
    %102 = vmatpush.msra.mxu0 %v71
    %103 = vmatpush.msra.mxu0 %v70
    %104 = vmatpush.msra.mxu0 %v69
    %105 = vmatpush.msra.mxu0 %v68
    %106 = vmatpush.msra.mxu0 %v67
    %107 = vmatpush.msra.mxu0 %v66
    %108 = vmatpush.msra.mxu0 %v65
    %109 = vmatpush.msra.mxu0 %v64
    %110 = vmatpush.msra.mxu0 %v63
    %111 = vmatmul.f32.gmra.mxu0 %v59
    %v112 = vpop.f32.mrf.mxu0
    %v113 = vadd.f32 0.0, %v112
    %114 = vmatmul.f32.gmra.mxu0 %v61
    %v115 = vpop.f32.mrf.mxu0
    %v116 = vadd.f32 0.0, %v115
    %117 = vdwg.mxu0
    %118 = vmatpush.msra.mxu0 %v94
    %119 = vmatpush.msra.mxu0 %v93
    %120 = vmatpush.msra.mxu0 %v92
    %121 = vmatpush.msra.mxu0 %v91
    %122 = vmatpush.msra.mxu0 %v90
    %123 = vmatpush.msra.mxu0 %v89
    %124 = vmatpush.msra.mxu0 %v88
    %125 = vmatpush.msra.mxu0 %v87
    %126 = vmatpush.msra.mxu0 %v86
    %127 = vmatpush.msra.mxu0 %v85
    %128 = vmatpush.msra.mxu0 %v84
    %129 = vmatpush.msra.mxu0 %v83
    %130 = vmatpush.msra.mxu0 %v82
    %131 = vmatpush.msra.mxu0 %v81
    %132 = vmatpush.msra.mxu0 %v80
    %133 = vmatpush.msra.mxu0 %v79
    %134 = vmatmul.f32.gmra.mxu0 %v60
    %v135 = vpop.f32.mrf.mxu0
    %v136 = vadd.f32 %v113, %v135
    %137 = vmatmul.f32.gmra.mxu0 %v62
    %v138 = vpop.f32.mrf.mxu0
    %v139 = vadd.f32 %v116, %v138
    %140 = vdwg.mxu0
    %v141 = vadd.f32 %v57, %v136
    %v142 = vadd.f32 %v58, %v139
    %143 = vst [vmem:[#allocation7] sm:$0xff] %v141
    %144 = vst [vmem:[#allocation7 + $0x8] sm:$0xff] %v142
    // Predicated region
    $region26: #{projection_head_forward.1} parent=1 // pred_check
      _
    $region27: #{projection_head_forward.1} parent=1 // pred_check_branch
      %146 = sbr.rel (0) target = $region29
    $region28: #{projection_head_forward.1} parent=1 // pred_region
      %148 = vsyncadd [#allocation4], 0
      %s149 = sshll.u32 [#allocation7], 4
      %s150 = int_to_ptr.vmem [resolvable:$true] %s149
      %s151 = sshll.u32 %s3, 4
      %s152 = int_to_ptr.hbm [resolvable:$true] %s151
      %157 = dma.vmem_to_hbm [thread:$0]  %s150, 256, %s152, [#allocation4], 128, 128, 8
    $region29: #{projection_head_forward.1} parent=1 // pred_fallthru
      _
    // Predicated region
    $region30: #{projection_head_forward.1} parent=1 // pred_check
      _
    $region31: #{projection_head_forward.1} parent=1 // pred_check_branch
      %159 = sbr.rel (0) target = $region33
    $region32: #{projection_head_forward.1} parent=1 // pred_region
      %161 = dma.done [#allocation4], 256
    $region33: #{projection_head_forward.1} parent=1 // pred_fallthru
      _
    %162 = vsyncpa [#allocation3], 1
    %163 = vsyncpa [#allocation6], 1
    %164 = vsyncpa [#allocation4], 1

</llo_original>
